<compile_context>
chip_gen: v7x
topology: tpu7x:2x2x1
jax: 0.10.0
libtpu: 0.0.40
codegen_flags: <defaults>
</compile_context>

<pallas_src>
import jax
import jax.numpy as jnp
from jax import lax
from jax.experimental import pallas as pl
from jax.experimental.pallas import tpu as pltpu

EPS = 1e-5
_VMEM_LIMIT = 48 * 1024 * 1024  # covers largest fused block (~26 MiB) on all of v5e/v6e/v7x


def _cparams():
  return pltpu.CompilerParams(
      dimension_semantics=("parallel",),
      vmem_limit_bytes=_VMEM_LIMIT)


# -----------------------------------------------------------------------------
# Pallas kernels (channels-last: activation tiles are (L, C), lane dim = C)
# -----------------------------------------------------------------------------

def _stem_kernel(xp_ref, dww_ref, dwb_ref, pww_ref, pwb_ref,
                 scale_ref, shift_ref, alpha_ref, o_ref):
  """Fused stem: depthwise k3 -> pointwise 1x1 (MXU) -> BN -> PReLU -> MaxPool(3,1,1)."""
  L = o_ref.shape[1]
  xp = xp_ref[0]                                          # (L+2, Cin), already zero-padded
  w = dww_ref[...]                                        # (3, Cin)
  d = (xp[0:L] * w[0:1] + xp[1:L + 1] * w[1:2] + xp[2:L + 2] * w[2:3]
       + dwb_ref[...])                                    # (L, Cin) on the VPU
  y = jnp.dot(d, pww_ref[...], preferred_element_type=jnp.float32) + pwb_ref[...]
  y = y * scale_ref[...] + shift_ref[...]                 # folded BatchNorm1d
  y = jnp.maximum(y, 0.0) + alpha_ref[...] * jnp.minimum(y, 0.0)   # PReLU
  ninf = jnp.full((1, y.shape[1]), -jnp.inf, y.dtype)
  yp = jnp.concatenate([ninf, y, ninf], axis=0)           # MaxPool1d(k=3, s=1, p=1)
  out = jnp.maximum(jnp.maximum(yp[0:L], yp[1:L + 1]), yp[2:L + 2])
  o_ref[0] = out.astype(o_ref.dtype)


def _make_block_kernel(in_kernel_taps, has_ds):
  """Fully fused ResidualBlock1d.

  in_kernel_taps: stride==1 path, single padded input, taps built in-kernel.
  otherwise     : stride==2 path, three pre-decimated taps passed in.
  """

  def block_kernel(*refs):
    idx = 0
    if in_kernel_taps:
      xp_ref = refs[0]
      idx = 1
    else:
      a0_ref, a1_ref, a2_ref = refs[0:3]
      idx = 3
    (dw1w_ref, dw1b_ref, pw1w_ref, pw1b_ref,
     dw2w_ref, dw2b_ref, pw2w_ref, pw2b_ref,
     bn2s_ref, bn2b_ref) = refs[idx:idx + 10]
    idx += 10
    if has_ds:
      dsw_ref, dss_ref, dsb_ref = refs[idx:idx + 3]
      idx += 3
    o_ref = refs[idx]
    Lout = o_ref.shape[1]

    # ---- conv1: depthwise k3 taps ----
    if in_kernel_taps:
      xp = xp_ref[0]                                      # (Lout+2, Cin)
      a0 = xp[0:Lout]
      a1 = xp[1:Lout + 1]                                 # == original x (residual)
      a2 = xp[2:Lout + 2]
    else:
      a0 = a0_ref[0]
      a1 = a1_ref[0]                                      # == x[::stride] (downsample input)
      a2 = a2_ref[0]

    w1 = dw1w_ref[...]                                    # (3, Cin)
    d1 = a0 * w1[0:1] + a1 * w1[1:2] + a2 * w1[2:3] + dw1b_ref[...]

    # pointwise 1x1 on the MXU
    h = jnp.dot(d1, pw1w_ref[...], preferred_element_type=jnp.float32) + pw1b_ref[...]

    # InstanceNorm1d (affine=False) over the spatial axis, then ReLU
    mu = jnp.mean(h, axis=0, keepdims=True)
    var = jnp.mean(jnp.square(h - mu), axis=0, keepdims=True)
    h = (h - mu) * lax.rsqrt(var + EPS)
    h = jnp.maximum(h, 0.0)

    # ---- conv2: depthwise k3 (stride 1, pad 1) on h, kept entirely in VMEM ----
    zrow = jnp.zeros((1, h.shape[1]), h.dtype)
    hp = jnp.concatenate([zrow, h, zrow], axis=0)         # (Lout+2, Cout)
    w2 = dw2w_ref[...]
    d2 = (hp[0:Lout] * w2[0:1] + hp[1:Lout + 1] * w2[1:2] + hp[2:Lout + 2] * w2[2:3]
          + dw2b_ref[...])
    y = jnp.dot(d2, pw2w_ref[...], preferred_element_type=jnp.float32) + pwb_or(pw2b_ref)
    y = y * bn2s_ref[...] + bn2b_ref[...]                 # folded BatchNorm1d

    # ---- residual path ----
    if has_ds:                                            # Dropout(identity) -> 1x1 conv -> BN
      res = jnp.dot(a1, dsw_ref[...], preferred_element_type=jnp.float32)
      res = res * dss_ref[...] + dsb_ref[...]
    else:
      res = a1

    o_ref[0] = jnp.maximum(y + res, 0.0).astype(o_ref.dtype)

  def pwb_or(ref):  # tiny helper to keep the expression above readable
    return ref[...]

  return block_kernel


def _avgpool_kernel(x_ref, o_ref):
  o_ref[0] = jnp.mean(x_ref[0], axis=0, keepdims=True)


# -----------------------------------------------------------------------------
# pallas_call wrappers
# -----------------------------------------------------------------------------

def stem_forward(x, dw_w, dw_b, pw_w, pw_b, scale, shift, alpha):
  """x: (N, L, Cin) channels-last -> (N, L, Cout). Conv1+BN+PReLU+MaxPool fused."""
  N, L, Cin = x.shape
  Cout = pw_w.shape[1]
  xp = jnp.pad(x, ((0, 0), (1, 1), (0, 0)))               # single padded copy, read once

  cin_vec = pl.BlockSpec((1, Cin), lambda n: (0, 0))
  cout_vec = pl.BlockSpec((1, Cout), lambda n: (0, 0))
  return pl.pallas_call(
      _stem_kernel,
      out_shape=jax.ShapeDtypeStruct((N, L, Cout), x.dtype),
      grid=(N,),
      in_specs=[pl.BlockSpec((1, L + 2, Cin), lambda n: (n, 0, 0)),
                pl.BlockSpec((3, Cin), lambda n: (0, 0)),
                cin_vec,
                pl.BlockSpec((Cin, Cout), lambda n: (0, 0)),
                cout_vec, cout_vec, cout_vec, cout_vec],
      out_specs=pl.BlockSpec((1, L, Cout), lambda n: (n, 0, 0)),
      compiler_params=_cparams(),
  )(xp, dw_w, dw_b.reshape(1, Cin), pw_w, pw_b.reshape(1, Cout),
    scale.reshape(1, Cout), shift.reshape(1, Cout), alpha.reshape(1, Cout))


def residual_block(x, blk):
  """Whole ResidualBlock1d as one fused pallas_call.  x: (N, L, Cin) -> (N, Lout, Cout)."""
  N, L, Cin = x.shape
  stride = blk["stride"]
  c1, c2 = blk["conv1"], blk["conv2"]
  Cout = c1["pw_w"].shape[1]
  Lout = (L + 2 - 3) // stride + 1
  has_ds = "ds_w" in blk
  s2, sh2 = _fold_bn(blk["bn2"])

  xp = jnp.pad(x, ((0, 0), (1, 1), (0, 0)))
  if stride == 1:
    # Single padded read; taps are built inside the kernel (no 3x HBM traffic).
    x_args = [xp]
    x_specs = [pl.BlockSpec((1, Lout + 2, Cin), lambda n: (n, 0, 0))]
  else:
    # Stride-2 decimation stays wrapper-side (cheap: 3 decimated taps ~= 1.5x input).
    span = stride * (Lout - 1) + 1
    x_args = [xp[:, k:k + span:stride, :] for k in range(3)]
    tap_spec = pl.BlockSpec((1, Lout, Cin), lambda n: (n, 0, 0))
    x_specs = [tap_spec, tap_spec, tap_spec]

  cin_vec = pl.BlockSpec((1, Cin), lambda n: (0, 0))
  cout_vec = pl.BlockSpec((1, Cout), lambda n: (0, 0))
  w_in = pl.BlockSpec((Cin, Cout), lambda n: (0, 0))
  w_out = pl.BlockSpec((Cout, Cout), lambda n: (0, 0))

  args = x_args + [
      c1["dw_w"], c1["dw_b"].reshape(1, Cin), c1["pw_w"], c1["pw_b"].reshape(1, Cout),
      c2["dw_w"], c2["dw_b"].reshape(1, Cout), c2["pw_w"], c2["pw_b"].reshape(1, Cout),
      s2.reshape(1, Cout), sh2.reshape(1, Cout)]
  in_specs = x_specs + [
      pl.BlockSpec((3, Cin), lambda n: (0, 0)), cin_vec, w_in, cout_vec,
      pl.BlockSpec((3, Cout), lambda n: (0, 0)), cout_vec, w_out, cout_vec,
      cout_vec, cout_vec]
  if has_ds:
    ds_s, ds_sh = _fold_bn(blk["ds_bn"])
    args += [blk["ds_w"], ds_s.reshape(1, Cout), ds_sh.reshape(1, Cout)]
    in_specs += [w_in, cout_vec, cout_vec]

  kernel = _make_block_kernel(stride == 1, has_ds)
  return pl.pallas_call(
      kernel,
      out_shape=jax.ShapeDtypeStruct((N, Lout, Cout), x.dtype),
      grid=(N,),
      in_specs=in_specs,
      out_specs=pl.BlockSpec((1, Lout, Cout), lambda n: (n, 0, 0)),
      compiler_params=_cparams(),
  )(*args)


def global_avg_pool(x):
  """AdaptiveAvgPool1d(1) + Flatten on (N, L, C) -> (N, C)."""
  N, L, C = x.shape
  out = pl.pallas_call(
      _avgpool_kernel,
      out_shape=jax.ShapeDtypeStruct((N, 1, C), x.dtype),
      grid=(N,),
      in_specs=[pl.BlockSpec((1, L, C), lambda n: (n, 0, 0))],
      out_specs=pl.BlockSpec((1, 1, C), lambda n: (n, 0, 0)),
      compiler_params=_cparams(),
  )(x)
  return out.reshape(N, C)


# -----------------------------------------------------------------------------
# Parameters & model
# -----------------------------------------------------------------------------

def _init_dwsep(key, cin, cout):
  k1, k2, k3, k4 = jax.random.split(key, 4)
  return dict(
      dw_w=0.3 * jax.random.normal(k1, (3, cin), jnp.float32),
      dw_b=0.1 * jax.random.normal(k2, (cin,), jnp.float32),
      pw_w=jax.random.normal(k3, (cin, cout), jnp.float32) / jnp.sqrt(float(cin)),
      pw_b=0.1 * jax.random.normal(k4, (cout,), jnp.float32),
  )


def _init_bn(key, c):
  k1, k2, k3, k4 = jax.random.split(key, 4)
  return dict(
      gamma=1.0 + 0.1 * jax.random.normal(k1, (c,), jnp.float32),
      beta=0.1 * jax.random.normal(k2, (c,), jnp.float32),
      mean=0.1 * jax.random.normal(k3, (c,), jnp.float32),
      var=jnp.abs(jax.random.normal(k4, (c,), jnp.float32)) + 0.5,
  )


def _fold_bn(bn):
  scale = bn["gamma"] / jnp.sqrt(bn["var"] + EPS)
  shift = bn["beta"] - bn["mean"] * scale
  return scale, shift


def _init_block(key, cin, cout, stride):
  keys = jax.random.split(key, 5)
  blk = dict(
      conv1=_init_dwsep(keys[0], cin, cout),   # + InstanceNorm1d (no params) + ReLU
      conv2=_init_dwsep(keys[1], cout, cout),  # + BatchNorm1d
      bn2=_init_bn(keys[2], cout),
      stride=stride,
  )
  if stride != 1 or cin != cout:               # downsample: Dropout -> 1x1 conv -> BN
    blk["ds_w"] = jax.random.normal(keys[3], (cin, cout), jnp.float32) / jnp.sqrt(float(cin))
    blk["ds_bn"] = _init_bn(keys[4], cout)
  return blk


def init_mresnet1d(key, in_channel=4, base_channel=128):
  keys = jax.random.split(key, 3)
  params = dict(
      conv1=_init_dwsep(keys[0], in_channel, base_channel),
      bn1=_init_bn(keys[1], base_channel),
      prelu_alpha=jnp.float32(0.25),
  )
  stage_defs = [
      (base_channel, base_channel * 2, 2, 2),
      (base_channel * 2, base_channel * 4, 3, 2),
      (base_channel * 4, base_channel * 8, 5, 2),
      (base_channel * 8, base_channel * 8, 2, 2),
  ]
  stages = []
  for (cin, cout, nblocks, stride), sk in zip(stage_defs,
                                              jax.random.split(keys[2], len(stage_defs))):
    bkeys = jax.random.split(sk, nblocks)
    blocks = [_init_block(bkeys[0], cin, cout, stride)]
    for i in range(1, nblocks):
      blocks.append(_init_block(bkeys[i], cout, cout, 1))
    stages.append(blocks)
  params["stages"] = stages
  return params


def mresnet1d_forward(params, x_ncl):
  """x_ncl: (N, C_in, L) as in PyTorch. Returns (N, 8 * base_channel)."""
  x = jnp.transpose(x_ncl, (0, 2, 1))          # channels-last (N, L, C)

  c1 = params["conv1"]
  cout = c1["pw_w"].shape[1]
  scale, shift = _fold_bn(params["bn1"])
  alpha = jnp.full((cout,), params["prelu_alpha"], jnp.float32)
  x = stem_forward(x, c1["dw_w"], c1["dw_b"], c1["pw_w"], c1["pw_b"],
                   scale, shift, alpha)
  for stage in params["stages"]:
    for blk in stage:
      x = residual_block(x, blk)
  return global_avg_pool(x)


# -----------------------------------------------------------------------------
# Pure-XLA reference (for correctness check only)
# -----------------------------------------------------------------------------

def _ref_forward(params, x):
  def dw_conv(x, w, b, stride):
    cin = x.shape[1]
    wt = jnp.transpose(w)[:, None, :]          # (Cin, 1, 3)
    y = lax.conv_general_dilated(x, wt, (stride,), [(1, 1)],
                                 dimension_numbers=("NCH", "OIH", "NCH"),
                                 feature_group_count=cin,
                                 precision=lax.Precision.HIGHEST)
    return y + b[None, :, None]

  def pw_conv(x, w, b=None, stride=1):
    wt = jnp.transpose(w)[:, :, None]          # (Cout, Cin, 1)
    y = lax.conv_general_dilated(x, wt, (stride,), [(0, 0)],
                                 dimension_numbers=("NCH", "OIH", "NCH"),
                                 precision=lax.Precision.HIGHEST)
    return y if b is None else y + b[None, :, None]

  def dwsep(x, p, stride):
    return pw_conv(dw_conv(x, p["dw_w"], p["dw_b"], stride), p["pw_w"], p["pw_b"])

  def bn(x, p):
    s = p["gamma"] / jnp.sqrt(p["var"] + EPS)
    return x * s[None, :, None] + (p["beta"] - p["mean"] * s)[None, :, None]

  def instnorm(x):
    mu = jnp.mean(x, axis=2, keepdims=True)
    var = jnp.mean(jnp.square(x - mu), axis=2, keepdims=True)
    return (x - mu) * lax.rsqrt(var + EPS)

  def relu(x):
    return jnp.maximum(x, 0.0)

  def prelu(x, a):
    return jnp.maximum(x, 0.0) + a * jnp.minimum(x, 0.0)

  def maxpool(x):
    L = x.shape[2]
    xp = jnp.pad(x, ((0, 0), (0, 0), (1, 1)), constant_values=-jnp.inf)
    return jnp.maximum(jnp.maximum(xp[:, :, 0:L], xp[:, :, 1:L + 1]), xp[:, :, 2:L + 2])

  x = prelu(bn(dwsep(x, params["conv1"], 1), params["bn1"]), params["prelu_alpha"])
  x = maxpool(x)
  for stage in params["stages"]:
    for blk in stage:
      s = blk["stride"]
      h = relu(instnorm(dwsep(x, blk["conv1"], s)))
      h = bn(dwsep(h, blk["conv2"], 1), blk["bn2"])
      if "ds_w" in blk:
        res = bn(pw_conv(x, blk["ds_w"], None, stride=s), blk["ds_bn"])
      else:
        res = x
      x = relu(h + res)
  return jnp.mean(x, axis=2)


# -----------------------------------------------------------------------------
# Demo / self-check
# -----------------------------------------------------------------------------

if __name__ == "__main__":
  N, C_IN, L = 2, 4, 32
  key = jax.random.PRNGKey(0)
  k_x, k_p = jax.random.split(key)
  x = jax.random.normal(k_x, (N, C_IN, L), jnp.float32)
  params = init_mresnet1d(k_p, in_channel=C_IN)

  y = jax.block_until_ready(mresnet1d_forward(params, x))
  assert y.shape == (N, 128 * 8), y.shape

  y_ref = jax.block_until_ready(_ref_forward(params, x))
  rel_err = float(jnp.max(jnp.abs(y - y_ref))) / (float(jnp.max(jnp.abs(y_ref))) + 1e-6)
  assert rel_err < 5e-2, f"Pallas forward mismatches XLA reference (rel err {rel_err})"

  print("KERNEL_OK")
</pallas_src>

<mosaic_0001>
module attributes {stable_mosaic.version = 11 : i64} {
  func.func @_stem_kernel(%arg0: i32, %arg1: memref<1x34x4xf32, #tpu.memory_space<vmem>>, %arg2: memref<3x4xf32, #tpu.memory_space<vmem>>, %arg3: memref<1x4xf32, #tpu.memory_space<vmem>>, %arg4: memref<4x128xf32, #tpu.memory_space<vmem>>, %arg5: memref<1x128xf32, #tpu.memory_space<vmem>>, %arg6: memref<1x128xf32, #tpu.memory_space<vmem>>, %arg7: memref<1x128xf32, #tpu.memory_space<vmem>>, %arg8: memref<1x128xf32, #tpu.memory_space<vmem>>, %arg9: memref<1x32x128xf32, #tpu.memory_space<vmem>>) attributes {dimension_semantics = [#tpu.dimension_semantics<parallel>], iteration_bounds = array<i64: 2>, scalar_prefetch = 0 : i64, scratch_operands = 0 : i64, tpu.core_type = #tpu.core_type<tc>, window_params = [{transform_indices = @transform_0, window_bounds = array<i64: 1, 34, 4>}, {pipeline_mode = #tpu.pipeline_mode<synchronous>, transform_indices = @transform_1, window_bounds = array<i64: 3, 4>}, {pipeline_mode = #tpu.pipeline_mode<synchronous>, transform_indices = @transform_2, window_bounds = array<i64: 1, 4>}, {pipeline_mode = #tpu.pipeline_mode<synchronous>, transform_indices = @transform_3, window_bounds = array<i64: 4, 128>}, {pipeline_mode = #tpu.pipeline_mode<synchronous>, transform_indices = @transform_4, window_bounds = array<i64: 1, 128>}, {pipeline_mode = #tpu.pipeline_mode<synchronous>, transform_indices = @transform_5, window_bounds = array<i64: 1, 128>}, {pipeline_mode = #tpu.pipeline_mode<synchronous>, transform_indices = @transform_6, window_bounds = array<i64: 1, 128>}, {pipeline_mode = #tpu.pipeline_mode<synchronous>, transform_indices = @transform_7, window_bounds = array<i64: 1, 128>}, {transform_indices = @transform_8, window_bounds = array<i64: 1, 32, 128>}]} {
    %c0 = arith.constant 0 : index
    %c0_0 = arith.constant 0 : index
    %c0_1 = arith.constant 0 : index
    %0 = vector.load %arg1[%c0, %c0_0, %c0_1] : memref<1x34x4xf32, #tpu.memory_space<vmem>>, vector<1x34x4xf32>
    %1 = vector.shape_cast %0 : vector<1x34x4xf32> to vector<34x4xf32>
    %c0_2 = arith.constant 0 : index
    %c0_3 = arith.constant 0 : index
    %2 = vector.load %arg2[%c0_2, %c0_3] : memref<3x4xf32, #tpu.memory_space<vmem>>, vector<3x4xf32>
    %3 = vector.extract_strided_slice %1 {offsets = [0, 0], sizes = [32, 4], strides = [1, 1]} : vector<34x4xf32> to vector<32x4xf32>
    %4 = vector.extract_strided_slice %2 {offsets = [0, 0], sizes = [1, 4], strides = [1, 1]} : vector<3x4xf32> to vector<1x4xf32>
    %5 = vector.broadcast %4 : vector<1x4xf32> to vector<32x4xf32>
    %6 = arith.mulf %3, %5 : vector<32x4xf32>
    %7 = vector.extract_strided_slice %1 {offsets = [1, 0], sizes = [32, 4], strides = [1, 1]} : vector<34x4xf32> to vector<32x4xf32>
    %8 = vector.extract_strided_slice %2 {offsets = [1, 0], sizes = [1, 4], strides = [1, 1]} : vector<3x4xf32> to vector<1x4xf32>
    %9 = vector.broadcast %8 : vector<1x4xf32> to vector<32x4xf32>
    %10 = arith.mulf %7, %9 : vector<32x4xf32>
    %11 = arith.addf %6, %10 : vector<32x4xf32>
    %12 = vector.extract_strided_slice %1 {offsets = [2, 0], sizes = [32, 4], strides = [1, 1]} : vector<34x4xf32> to vector<32x4xf32>
    %13 = vector.extract_strided_slice %2 {offsets = [2, 0], sizes = [1, 4], strides = [1, 1]} : vector<3x4xf32> to vector<1x4xf32>
    %14 = vector.broadcast %13 : vector<1x4xf32> to vector<32x4xf32>
    %15 = arith.mulf %12, %14 : vector<32x4xf32>
    %16 = arith.addf %11, %15 : vector<32x4xf32>
    %c0_4 = arith.constant 0 : index
    %c0_5 = arith.constant 0 : index
    %17 = vector.load %arg3[%c0_4, %c0_5] : memref<1x4xf32, #tpu.memory_space<vmem>>, vector<1x4xf32>
    %18 = vector.broadcast %17 : vector<1x4xf32> to vector<32x4xf32>
    %19 = arith.addf %16, %18 : vector<32x4xf32>
    %c0_6 = arith.constant 0 : index
    %c0_7 = arith.constant 0 : index
    %20 = vector.load %arg4[%c0_6, %c0_7] : memref<4x128xf32, #tpu.memory_space<vmem>>, vector<4x128xf32>
    %cst = arith.constant dense<0.000000e+00> : vector<32x128xf32>
    %21 = tpu.matmul %19, %20, %cst {dimension_numbers = #tpu.dot_dimension_numbers<[1], [0], [0], [1], [0, 0, 1, 1], [], []>} : vector<32x4xf32>, vector<4x128xf32>, vector<32x128xf32> -> vector<32x128xf32>
    %c0_8 = arith.constant 0 : index
    %c0_9 = arith.constant 0 : index
    %22 = vector.load %arg5[%c0_8, %c0_9] : memref<1x128xf32, #tpu.memory_space<vmem>>, vector<1x128xf32>
    %23 = vector.broadcast %22 : vector<1x128xf32> to vector<32x128xf32>
    %24 = arith.addf %21, %23 : vector<32x128xf32>
    %c0_10 = arith.constant 0 : index
    %c0_11 = arith.constant 0 : index
    %25 = vector.load %arg6[%c0_10, %c0_11] : memref<1x128xf32, #tpu.memory_space<vmem>>, vector<1x128xf32>
    %26 = vector.broadcast %25 : vector<1x128xf32> to vector<32x128xf32>
    %27 = arith.mulf %24, %26 : vector<32x128xf32>
    %c0_12 = arith.constant 0 : index
    %c0_13 = arith.constant 0 : index
    %28 = vector.load %arg7[%c0_12, %c0_13] : memref<1x128xf32, #tpu.memory_space<vmem>>, vector<1x128xf32>
    %29 = vector.broadcast %28 : vector<1x128xf32> to vector<32x128xf32>
    %30 = arith.addf %27, %29 : vector<32x128xf32>
    %cst_14 = arith.constant 0.000000e+00 : f32
    %31 = vector.broadcast %cst_14 : f32 to vector<32x128xf32>
    %32 = arith.maximumf %30, %31 : vector<32x128xf32>
    %c0_15 = arith.constant 0 : index
    %c0_16 = arith.constant 0 : index
    %33 = vector.load %arg8[%c0_15, %c0_16] : memref<1x128xf32, #tpu.memory_space<vmem>>, vector<1x128xf32>
    %cst_17 = arith.constant 0.000000e+00 : f32
    %34 = vector.broadcast %cst_17 : f32 to vector<32x128xf32>
    %35 = arith.minimumf %30, %34 : vector<32x128xf32>
    %36 = vector.broadcast %33 : vector<1x128xf32> to vector<32x128xf32>
    %37 = arith.mulf %36, %35 : vector<32x128xf32>
    %38 = arith.addf %32, %37 : vector<32x128xf32>
    %cst_18 = arith.constant 0xFF800000 : f32
    %39 = vector.broadcast %cst_18 : f32 to vector<1x128xf32>
    %40 = tpu.concatenate %39, %38, %39 in 0 : vector<1x128xf32>, vector<32x128xf32>, vector<1x128xf32> -> vector<34x128xf32>
    %41 = vector.extract_strided_slice %40 {offsets = [0, 0], sizes = [32, 128], strides = [1, 1]} : vector<34x128xf32> to vector<32x128xf32>
    %42 = vector.extract_strided_slice %40 {offsets = [1, 0], sizes = [32, 128], strides = [1, 1]} : vector<34x128xf32> to vector<32x128xf32>
    %43 = arith.maximumf %41, %42 : vector<32x128xf32>
    %44 = vector.extract_strided_slice %40 {offsets = [2, 0], sizes = [32, 128], strides = [1, 1]} : vector<34x128xf32> to vector<32x128xf32>
    %45 = arith.maximumf %43, %44 : vector<32x128xf32>
    %c0_19 = arith.constant 0 : index
    %c0_20 = arith.constant 0 : index
    %c0_21 = arith.constant 0 : index
    %46 = vector.load %arg9[%c0_19, %c0_20, %c0_21] : memref<1x32x128xf32, #tpu.memory_space<vmem>>, vector<1x32x128xf32>
    %47 = vector.shape_cast %46 : vector<1x32x128xf32> to vector<32x128xf32>
    %48 = vector.shape_cast %45 : vector<32x128xf32> to vector<1x32x128xf32>
    tpu.vector_store %arg9[%c0_19, %c0_20, %c0_21], %48 {strides = array<i32>} : memref<1x32x128xf32, #tpu.memory_space<vmem>>, vector<1x32x128xf32>,
    return
  }
  func.func @transform_0(%arg0: i32) -> (i32, i32, i32) {
    %c0_i32 = arith.constant 0 : i32
    %c0_i32_0 = arith.constant 0 : i32
    %c0_i32_1 = arith.constant 0 : i32
    return %arg0, %c0_i32, %c0_i32_0 : i32, i32, i32
  }
  func.func @transform_1(%arg0: i32) -> (i32, i32) {
    %c0_i32 = arith.constant 0 : i32
    %c0_i32_0 = arith.constant 0 : i32
    %c0_i32_1 = arith.constant 0 : i32
    return %c0_i32, %c0_i32_0 : i32, i32
  }
  func.func @transform_2(%arg0: i32) -> (i32, i32) {
    %c0_i32 = arith.constant 0 : i32
    %c0_i32_0 = arith.constant 0 : i32
    %c0_i32_1 = arith.constant 0 : i32
    return %c0_i32, %c0_i32_0 : i32, i32
  }
  func.func @transform_3(%arg0: i32) -> (i32, i32) {
    %c0_i32 = arith.constant 0 : i32
    %c0_i32_0 = arith.constant 0 : i32
    %c0_i32_1 = arith.constant 0 : i32
    return %c0_i32, %c0_i32_0 : i32, i32
  }
  func.func @transform_4(%arg0: i32) -> (i32, i32) {
    %c0_i32 = arith.constant 0 : i32
    %c0_i32_0 = arith.constant 0 : i32
    %c0_i32_1 = arith.constant 0 : i32
    return %c0_i32, %c0_i32_0 : i32, i32
  }
  func.func @transform_5(%arg0: i32) -> (i32, i32) {
    %c0_i32 = arith.constant 0 : i32
    %c0_i32_0 = arith.constant 0 : i32
    %c0_i32_1 = arith.constant 0 : i32
    return %c0_i32, %c0_i32_0 : i32, i32
  }
  func.func @transform_6(%arg0: i32) -> (i32, i32) {
    %c0_i32 = arith.constant 0 : i32
    %c0_i32_0 = arith.constant 0 : i32
    %c0_i32_1 = arith.constant 0 : i32
    return %c0_i32, %c0_i32_0 : i32, i32
  }
  func.func @transform_7(%arg0: i32) -> (i32, i32) {
    %c0_i32 = arith.constant 0 : i32
    %c0_i32_0 = arith.constant 0 : i32
    %c0_i32_1 = arith.constant 0 : i32
    return %c0_i32, %c0_i32_0 : i32, i32
  }
  func.func @transform_8(%arg0: i32) -> (i32, i32, i32) {
    %c0_i32 = arith.constant 0 : i32
    %c0_i32_0 = arith.constant 0 : i32
    %c0_i32_1 = arith.constant 0 : i32
    return %arg0, %c0_i32, %c0_i32_0 : i32, i32, i32
  }
}

</mosaic_0001>

<llo_original>
// kernel: tpu_custom_call.1
$region0: #{tpu_custom_call.1}
  #allocation0 [shape = 'u32[]', space=smem, size = 0x4, offset = 0x4, fixed_abs, tag = 'smem constant byte address 0x4 - core index']
  #allocation1 [shape = 'u32[144,128]{1,0:T(1,128)}', space=vmem, size = 0x12000, scoped, tag = 'internal scratch']
  %s0 = inlined_call_operand.vmem [shape: f32[2,34,4], index: 0, kind: input, shape index: {}]
  %s1 = inlined_call_operand.vmem [shape: f32[3,4], index: 1, kind: input, shape index: {}]
  %s2 = inlined_call_operand.vmem [shape: f32[1,4], index: 2, kind: input, shape index: {}]
  %s3 = inlined_call_operand.vmem [shape: f32[4,128], index: 3, kind: input, shape index: {}]
  %s4 = inlined_call_operand.vmem [shape: f32[1,128], index: 4, kind: input, shape index: {}]
  %s5 = inlined_call_operand.vmem [shape: f32[1,128], index: 5, kind: input, shape index: {}]
  %s6 = inlined_call_operand.vmem [shape: f32[1,128], index: 6, kind: input, shape index: {}]
  %s7 = inlined_call_operand.vmem [shape: f32[1,128], index: 7, kind: input, shape index: {}]
  %s8 = inlined_call_operand.hbm [shape: f32[2,32,128], index: 8, kind: output, shape index: {}]
  %s9 = sld [smem:[#allocation0]]
  $region65: #{tpu_custom_call.1} parent=0
    _
  %s11 = ssub.s32 1, %s9
  %s12 = scalar_select 0, %s11, %s9
  $region1: #{tpu_custom_call.1} parent=0
    #allocation2 [shape = 'u8[32768]{0}', space=vmem, size = 0x8000, scoped, tag = 'output window, operand 0']
    #allocation3 [shape = 's32[2]{0}', space=sflag, size = 0x8, scoped, tag = 'scoped memory for tpu_custom_call.1']
    %13 = vsyncpa [#allocation3], 0
    %s14 = scalar_lea.sflag [#allocation3], 1
    %15 = vsyncpa %s14, 0
    loop: start=0, step=1, limit=4
    $region2: #{tpu_custom_call.1} parent=1 // loop_pre_header
      _
    $region3: #{tpu_custom_call.1} parent=1 // loop_header
      %s17 = sphi 0, %s21
      %p18 = scmp.ge.s32.totalorder %s17, 4
      %s27 = sphi 0, %s29
      %s30 = sphi 0, %s27
      %s31 = sphi 0, %s30
      %s47 = sphi 0, %s31
      %s51 = sphi 0, %s51
      %s53 = sphi 0, %s51
      %s54 = sphi 0, %s53
      %s68 = sphi 0, %s54
      %s72 = sphi 0, %s72
      %s74 = sphi 0, %s72
      %s75 = sphi 0, %s74
      %s89 = sphi 0, %s75
      %s93 = sphi 0, %s93
      %s95 = sphi 0, %s93
      %s96 = sphi 0, %s95
      %s110 = sphi 0, %s96
      %s114 = sphi 0, %s114
      %s116 = sphi 0, %s114
      %s117 = sphi 0, %s116
      %s131 = sphi 0, %s117
      %s135 = sphi 0, %s135
      %s137 = sphi 0, %s135
      %s138 = sphi 0, %s137
      %s152 = sphi 0, %s138
      %s156 = sphi 0, %s156
      %s158 = sphi 0, %s156
      %s159 = sphi 0, %s158
      %s173 = sphi 0, %s159
      %s177 = sphi 0, %s177
      %s179 = sphi 0, %s177
      %s180 = sphi 0, %s179
      %s194 = sphi 0, %s180
      %s200 = sphi 0, %s202
      %s203 = sphi 0, %s200
      %s204 = sphi 0, %s203
      %s220 = sphi 0, %s204
    $region4: #{tpu_custom_call.1} parent=1 // loop_header_branch
      %20 = sbr.rel (%p18) target = $region8
    $region5: #{tpu_custom_call.1} parent=1 // loop_body
      %s22 = ssub.s32 %s17, 1
      %s23 = ssub.s32 %s17, 2
      %s24 = sadd.s32 %s17, 1
      %s25 = ssub.s32 %s17, %s24
      %p26 = scmp.eq.s32.totalorder %s25, 0
      %s28 = sadd.s32 %s27, 1
      %s29 = scalar_select %p26, %s27, %s28
      %p32 = pneg %p26
      %p33 = scmp.eq.s32.totalorder %s17, 1
      %p34 = por %p32, %p33
      %p35 = scmp.ne.s32.totalorder %s27, %s30
      %p36 = scmp.eq.s32.totalorder %s17, 0
      %p37 = por %p35, %p36
      %p38 = scmp.ne.s32.totalorder %s27, %s30
      %p39 = scmp.eq.s32.totalorder %s22, 1
      %p40 = por %p38, %p39
      %p41 = scmp.ne.s32.totalorder %s30, %s31
      %p42 = scmp.eq.s32.totalorder %s22, 0
      %p43 = por %p41, %p42
      %p44 = scmp.ne.s32.totalorder %s30, %s31
      %p45 = scmp.eq.s32.totalorder %s23, 1
      %p46 = por %p44, %p45
      %p48 = scmp.ne.s32.totalorder %s31, %s47
      %p49 = scmp.eq.s32.totalorder %s23, 0
      %p50 = por %p48, %p49
      %s52 = sadd.s32 %s51, 1
      %p55 = scmp.eq.s32.totalorder %s17, 1
      %p56 = scmp.ne.s32.totalorder %s51, %s53
      %p57 = scmp.eq.s32.totalorder %s17, 0
      %p58 = por %p56, %p57
      %p59 = scmp.ne.s32.totalorder %s51, %s53
      %p60 = scmp.eq.s32.totalorder %s22, 1
      %p61 = por %p59, %p60
      %p62 = scmp.ne.s32.totalorder %s53, %s54
      %p63 = scmp.eq.s32.totalorder %s22, 0
      %p64 = por %p62, %p63
      %p65 = scmp.ne.s32.totalorder %s53, %s54
      %p66 = scmp.eq.s32.totalorder %s23, 1
      %p67 = por %p65, %p66
      %p69 = scmp.ne.s32.totalorder %s54, %s68
      %p70 = scmp.eq.s32.totalorder %s23, 0
      %p71 = por %p69, %p70
      %s73 = sadd.s32 %s72, 1
      %p76 = scmp.eq.s32.totalorder %s17, 1
      %p77 = scmp.ne.s32.totalorder %s72, %s74
      %p78 = scmp.eq.s32.totalorder %s17, 0
      %p79 = por %p77, %p78
      %p80 = scmp.ne.s32.totalorder %s72, %s74
      %p81 = scmp.eq.s32.totalorder %s22, 1
      %p82 = por %p80, %p81
      %p83 = scmp.ne.s32.totalorder %s74, %s75
      %p84 = scmp.eq.s32.totalorder %s22, 0
      %p85 = por %p83, %p84
      %p86 = scmp.ne.s32.totalorder %s74, %s75
      %p87 = scmp.eq.s32.totalorder %s23, 1
      %p88 = por %p86, %p87
      %p90 = scmp.ne.s32.totalorder %s75, %s89
      %p91 = scmp.eq.s32.totalorder %s23, 0
      %p92 = por %p90, %p91
      %s94 = sadd.s32 %s93, 1
      %p97 = scmp.eq.s32.totalorder %s17, 1
      %p98 = scmp.ne.s32.totalorder %s93, %s95
      %p99 = scmp.eq.s32.totalorder %s17, 0
      %p100 = por %p98, %p99
      %p101 = scmp.ne.s32.totalorder %s93, %s95
      %p102 = scmp.eq.s32.totalorder %s22, 1
      %p103 = por %p101, %p102
      %p104 = scmp.ne.s32.totalorder %s95, %s96
      %p105 = scmp.eq.s32.totalorder %s22, 0
      %p106 = por %p104, %p105
      %p107 = scmp.ne.s32.totalorder %s95, %s96
      %p108 = scmp.eq.s32.totalorder %s23, 1
      %p109 = por %p107, %p108
      %p111 = scmp.ne.s32.totalorder %s96, %s110
      %p112 = scmp.eq.s32.totalorder %s23, 0
      %p113 = por %p111, %p112
      %s115 = sadd.s32 %s114, 1
      %p118 = scmp.eq.s32.totalorder %s17, 1
      %p119 = scmp.ne.s32.totalorder %s114, %s116
      %p120 = scmp.eq.s32.totalorder %s17, 0
      %p121 = por %p119, %p120
      %p122 = scmp.ne.s32.totalorder %s114, %s116
      %p123 = scmp.eq.s32.totalorder %s22, 1
      %p124 = por %p122, %p123
      %p125 = scmp.ne.s32.totalorder %s116, %s117
      %p126 = scmp.eq.s32.totalorder %s22, 0
      %p127 = por %p125, %p126
      %p128 = scmp.ne.s32.totalorder %s116, %s117
      %p129 = scmp.eq.s32.totalorder %s23, 1
      %p130 = por %p128, %p129
      %p132 = scmp.ne.s32.totalorder %s117, %s131
      %p133 = scmp.eq.s32.totalorder %s23, 0
      %p134 = por %p132, %p133
      %s136 = sadd.s32 %s135, 1
      %p139 = scmp.eq.s32.totalorder %s17, 1
      %p140 = scmp.ne.s32.totalorder %s135, %s137
      %p141 = scmp.eq.s32.totalorder %s17, 0
      %p142 = por %p140, %p141
      %p143 = scmp.ne.s32.totalorder %s135, %s137
      %p144 = scmp.eq.s32.totalorder %s22, 1
      %p145 = por %p143, %p144
      %p146 = scmp.ne.s32.totalorder %s137, %s138
      %p147 = scmp.eq.s32.totalorder %s22, 0
      %p148 = por %p146, %p147
      %p149 = scmp.ne.s32.totalorder %s137, %s138
      %p150 = scmp.eq.s32.totalorder %s23, 1
      %p151 = por %p149, %p150
      %p153 = scmp.ne.s32.totalorder %s138, %s152
      %p154 = scmp.eq.s32.totalorder %s23, 0
      %p155 = por %p153, %p154
      %s157 = sadd.s32 %s156, 1
      %p160 = scmp.eq.s32.totalorder %s17, 1
      %p161 = scmp.ne.s32.totalorder %s156, %s158
      %p162 = scmp.eq.s32.totalorder %s17, 0
      %p163 = por %p161, %p162
      %p164 = scmp.ne.s32.totalorder %s156, %s158
      %p165 = scmp.eq.s32.totalorder %s22, 1
      %p166 = por %p164, %p165
      %p167 = scmp.ne.s32.totalorder %s158, %s159
      %p168 = scmp.eq.s32.totalorder %s22, 0
      %p169 = por %p167, %p168
      %p170 = scmp.ne.s32.totalorder %s158, %s159
      %p171 = scmp.eq.s32.totalorder %s23, 1
      %p172 = por %p170, %p171
      %p174 = scmp.ne.s32.totalorder %s159, %s173
      %p175 = scmp.eq.s32.totalorder %s23, 0
      %p176 = por %p174, %p175
      %s178 = sadd.s32 %s177, 1
      %p181 = scmp.eq.s32.totalorder %s17, 1
      %p182 = scmp.ne.s32.totalorder %s177, %s179
      %p183 = scmp.eq.s32.totalorder %s17, 0
      %p184 = por %p182, %p183
      %p185 = scmp.ne.s32.totalorder %s177, %s179
      %p186 = scmp.eq.s32.totalorder %s22, 1
      %p187 = por %p185, %p186
      %p188 = scmp.ne.s32.totalorder %s179, %s180
      %p189 = scmp.eq.s32.totalorder %s22, 0
      %p190 = por %p188, %p189
      %p191 = scmp.ne.s32.totalorder %s179, %s180
      %p192 = scmp.eq.s32.totalorder %s23, 1
      %p193 = por %p191, %p192
      %p195 = scmp.ne.s32.totalorder %s180, %s194
      %p196 = scmp.eq.s32.totalorder %s23, 0
      %p197 = por %p195, %p196
      %s198 = ssub.s32 %s17, %s24
      %p199 = scmp.eq.s32.totalorder %s198, 0
      %s201 = sadd.s32 %s200, 1
      %s202 = scalar_select %p199, %s200, %s201
      %p205 = pneg %p199
      %p206 = scmp.eq.s32.totalorder %s17, 1
      %p207 = por %p205, %p206
      %p208 = scmp.ne.s32.totalorder %s200, %s203
      %p209 = scmp.eq.s32.totalorder %s17, 0
      %p210 = por %p208, %p209
      %p211 = scmp.ne.s32.totalorder %s200, %s203
      %p212 = scmp.eq.s32.totalorder %s22, 1
      %p213 = por %p211, %p212
      %p214 = scmp.ne.s32.totalorder %s203, %s204
      %p215 = scmp.eq.s32.totalorder %s22, 0
      %p216 = por %p214, %p215
      %p217 = scmp.ne.s32.totalorder %s203, %s204
      %p218 = scmp.eq.s32.totalorder %s23, 1
      %p219 = por %p217, %p218
      %p221 = scmp.ne.s32.totalorder %s204, %s220
      %p222 = scmp.eq.s32.totalorder %s23, 0
      %p223 = por %p221, %p222
      %p224 = scmp.le.s32.totalorder 1, %s17
      %p225 = scmp.lt.s32.totalorder %s17, 3
      %p226 = pnand %p224, %p225
      %p227 = pneg %p226
      // Predicated region
      $region9: #{tpu_custom_call.1} parent=5 // pred_check
        _
      $region10: #{tpu_custom_call.1} parent=5 // pred_check_branch
        %229 = sbr.rel (%p226) target = $region12
      $region11: #{tpu_custom_call.1} parent=5 // pred_region
        %s230 = ssub.s32 %s17, 1
        // Predicated region
        $region13: #{tpu_custom_call.1} parent=11 // pred_check
          %p231 = pneg %p64
        $region14: #{tpu_custom_call.1} parent=11 // pred_check_branch
          %233 = sbr.rel (%p231) target = $region16
        $region15: #{tpu_custom_call.1} parent=11 // pred_region
          _
        $region16: #{tpu_custom_call.1} parent=11 // pred_fallthru
          _
        // Predicated region
        $region17: #{tpu_custom_call.1} parent=11 // pred_check
          %p234 = pneg %p85
        $region18: #{tpu_custom_call.1} parent=11 // pred_check_branch
          %236 = sbr.rel (%p234) target = $region20
        $region19: #{tpu_custom_call.1} parent=11 // pred_region
          _
        $region20: #{tpu_custom_call.1} parent=11 // pred_fallthru
          _
        // Predicated region
        $region21: #{tpu_custom_call.1} parent=11 // pred_check
          %p237 = pneg %p106
        $region22: #{tpu_custom_call.1} parent=11 // pred_check_branch
          %239 = sbr.rel (%p237) target = $region24
        $region23: #{tpu_custom_call.1} parent=11 // pred_region
          _
        $region24: #{tpu_custom_call.1} parent=11 // pred_fallthru
          _
        // Predicated region
        $region25: #{tpu_custom_call.1} parent=11 // pred_check
          %p240 = pneg %p127
        $region26: #{tpu_custom_call.1} parent=11 // pred_check_branch
          %242 = sbr.rel (%p240) target = $region28
        $region27: #{tpu_custom_call.1} parent=11 // pred_region
          _
        $region28: #{tpu_custom_call.1} parent=11 // pred_fallthru
          _
        // Predicated region
        $region29: #{tpu_custom_call.1} parent=11 // pred_check
          %p243 = pneg %p148
        $region30: #{tpu_custom_call.1} parent=11 // pred_check_branch
          %245 = sbr.rel (%p243) target = $region32
        $region31: #{tpu_custom_call.1} parent=11 // pred_region
          _
        $region32: #{tpu_custom_call.1} parent=11 // pred_fallthru
          _
        // Predicated region
        $region33: #{tpu_custom_call.1} parent=11 // pred_check
          %p246 = pneg %p169
        $region34: #{tpu_custom_call.1} parent=11 // pred_check_branch
          %248 = sbr.rel (%p246) target = $region36
        $region35: #{tpu_custom_call.1} parent=11 // pred_region
          _
        $region36: #{tpu_custom_call.1} parent=11 // pred_fallthru
          _
        // Predicated region
        $region37: #{tpu_custom_call.1} parent=11 // pred_check
          %p249 = pneg %p190
        $region38: #{tpu_custom_call.1} parent=11 // pred_check_branch
          %251 = sbr.rel (%p249) target = $region40
        $region39: #{tpu_custom_call.1} parent=11 // pred_region
          _
        $region40: #{tpu_custom_call.1} parent=11 // pred_fallthru
          _
      $region12: #{tpu_custom_call.1} parent=5 // pred_fallthru
        _
      %p252 = scmp.lt.s32.totalorder %s17, 2
      // Predicated region
      $region41: #{tpu_custom_call.1} parent=5 // pred_check
        %p253 = pneg %p252
      $region42: #{tpu_custom_call.1} parent=5 // pred_check_branch
        %255 = sbr.rel (%p253) target = $region44
      $region43: #{tpu_custom_call.1} parent=5 // pred_region
        // Predicated region
        $region45: #{tpu_custom_call.1} parent=43 // pred_check
          %p256 = pneg %p37
        $region46: #{tpu_custom_call.1} parent=43 // pred_check_branch
          %258 = sbr.rel (%p256) target = $region48
        $region47: #{tpu_custom_call.1} parent=43 // pred_region
          %p259 = scmp.lt.s32.totalorder %s17, 1
          %s260 = scalar_select %p259, %s17, 1
          %s261 = smul.addr %s260, 5
          %s262 = smul.addr %s261, 8
          %s263 = scalar_lea.vmem %s0, %s262
        $region48: #{tpu_custom_call.1} parent=43 // pred_fallthru
          _
      $region44: #{tpu_custom_call.1} parent=5 // pred_fallthru
        _
      %p264 = scmp.le.s32.totalorder 1, %s17
      %p265 = scmp.lt.s32.totalorder %s17, 3
      %p266 = pnand %p264, %p265
      %p267 = pneg %p266
      // Predicated region
      $region49: #{tpu_custom_call.1} parent=5 // pred_check
        _
      $region50: #{tpu_custom_call.1} parent=5 // pred_check_branch
        %269 = sbr.rel (%p266) target = $region52
      $region51: #{tpu_custom_call.1} parent=5 // pred_region
        %s270 = ssub.s32 %s17, 1
        %p271 = scmp.lt.s32.totalorder %s22, 1
        %s272 = scalar_select %p271, %s22, 1
        %s273 = smul.addr %s272, 5
        %s274 = smul.addr %s273, 8
        %s275 = scalar_lea.vmem %s0, %s274
        %p276 = pneg %p43
        %p277 = pneg %p40
        %p278 = pneg %p64
        %p279 = pneg %p61
        %p280 = pneg %p85
        %p281 = pneg %p82
        %p282 = pneg %p106
        %p283 = pneg %p103
        %p284 = pneg %p127
        %p285 = pneg %p124
        %p286 = pneg %p148
        %p287 = pneg %p145
        %p288 = pneg %p169
        %p289 = pneg %p166
        %p290 = pneg %p190
        %p291 = pneg %p187
        %p292 = pneg %p216
        %p293 = pneg %p213
        %s294 = sand.u32 %s203, 1
        %s295 = scalar_lea.sflag [#allocation3], %s294
        %s296 = sand.u32 %s203, 1
        %s297 = smul.addr %s296, 32
        %s298 = scalar_lea.vmem [#allocation2], %s297
        %p299 = scmp.lt.s32.totalorder %s22, 1
        %s300 = scalar_select %p299, %s22, 1
        %s301 = smul.addr %s300, 5
        %s302 = smul.addr %s301, 8
        %s303 = scalar_lea.vmem %s0, %s302
        %v304 = vld [vmem:[%s303] sm:$0xff]
        %v305 = vld [vmem:[%s303 + $0x8] sm:$0xff]
        %v306 = vld [vmem:[%s303 + $0x10] sm:$0xff]
        %v307 = vld [vmem:[%s303 + $0x18] sm:$0xff]
        %v308 = vld [vmem:[%s303 + $0x20] sm:$0x3]
        %v309 = vld [vmem:[%s1] sm:$0x7]
        %v310 = vlaneseq
        %v311 = vshrl.u32 %v310, 7
        %v312 = vsub.s32 0, %v311
        %v313 = vrot.slane %v309, %v312
        %v314 = vmul.f32 %v304, %v313
        %v315 = vmul.f32 %v305, %v313
        %v316 = vmul.f32 %v306, %v313
        %v317 = vmul.f32 %v307, %v313
        %v318 = vlaneseq
        %v319 = vshrl.u32 %v318, 7
        %v320 = vsub.s32 1, %v319
        %v321 = vrot.slane %v309, %v320
        %v322 = vmul.f32 %v304, %v321
        %v323 = vmul.f32 %v305, %v321
        %v324 = vmul.f32 %v306, %v321
        %v325 = vmul.f32 %v307, %v321
        %v326 = vmul.f32 %v308, %v321
        %vm332 = vcmask 1046528
        %v333 = vrot.slane %v322, 1
        %v334 = vrot.slane %v323, 1
        %v335 = vsel %vm332, %v333, %v334
        %v336 = vrot.slane %v324, 1
        %v337 = vsel %vm332, %v334, %v336
        %v338 = vrot.slane %v325, 1
        %v339 = vsel %vm332, %v336, %v338
        %v340 = vrot.slane %v326, 1
        %v341 = vsel %vm332, %v338, %v340
        %v346 = vadd.f32 %v314, %v335
        %v347 = vadd.f32 %v315, %v337
        %v348 = vadd.f32 %v316, %v339
        %v349 = vadd.f32 %v317, %v341
        %v350 = vlaneseq
        %v351 = vshrl.u32 %v350, 7
        %v352 = vsub.s32 2, %v351
        %v353 = vrot.slane %v309, %v352
        %v354 = vmul.f32 %v304, %v353
        %v355 = vmul.f32 %v305, %v353
        %v356 = vmul.f32 %v306, %v353
        %v357 = vmul.f32 %v307, %v353
        %v358 = vmul.f32 %v308, %v353
        %vm364 = vcmask 1045504
        %v365 = vrot.slane %v354, 2
        %v366 = vrot.slane %v355, 2
        %v367 = vsel %vm364, %v365, %v366
        %v368 = vrot.slane %v356, 2
        %v369 = vsel %vm364, %v366, %v368
        %v370 = vrot.slane %v357, 2
        %v371 = vsel %vm364, %v368, %v370
        %v372 = vrot.slane %v358, 2
        %v373 = vsel %vm364, %v370, %v372
        %v378 = vadd.f32 %v346, %v367
        %v379 = vadd.f32 %v347, %v369
        %v380 = vadd.f32 %v348, %v371
        %v381 = vadd.f32 %v349, %v373
        %v382 = vld [vmem:[%s2] sm:$0x1]
        %v384 = vlaneseq
        %v385 = vshrl.u32 %v384, 7
        %v386 = vsub.s32 0, %v385
        %v387 = vrot.slane %v382, %v386
        %v389 = vadd.f32 %v378, %v387
        %v390 = vadd.f32 %v379, %v387
        %v391 = vadd.f32 %v380, %v387
        %v392 = vadd.f32 %v381, %v387
        %v393 = vld [vmem:[%s3] sm:$0xf]
        %v394 = vld [vmem:[%s4] sm:$0x1]
        %v396 = vlaneseq
        %v397 = vshrl.u32 %v396, 7
        %v398 = vsub.s32 0, %v397
        %v399 = vrot.slane %v394, %v398
        %vm401 = vcmask 31744
        %v403 = vsel %vm401, %v389, 0
        %v406 = vsel %vm401, %v390, 0
        %v409 = vsel %vm401, %v391, 0
        %v412 = vsel %vm401, %v392, 0
        %vm414 = vcmask 1043456
        %v416 = vsel %vm414, %v393, 0
        %418 = vmatprep.subr.mxu0 0.0
        %419 = vmatpush1.msra.mxu0 %v416
        %420 = vmatprep.subr.mxu0 0.0
        %421 = vmatpush1.msra.mxu0 0.0
        %422 = vmatprep.subr.mxu0 0.0
        %423 = vmatpush1.msra.mxu0 0.0
        %424 = vmatprep.subr.mxu0 0.0
        %425 = vmatpush1.msra.mxu0 0.0
        %426 = vmatprep.subr.mxu0 0.0
        %427 = vmatpush1.msra.mxu0 0.0
        %428 = vmatprep.subr.mxu0 0.0
        %429 = vmatpush1.msra.mxu0 0.0
        %430 = vmatprep.subr.mxu0 0.0
        %431 = vmatpush1.msra.mxu0 0.0
        %432 = vmatprep.subr.mxu0 0.0
        %433 = vmatpush1.msra.mxu0 0.0
        %434 = vmatprep.subr.mxu0 0.0
        %435 = vmatpush1.msra.mxu0 0.0
        %436 = vmatprep.subr.mxu0 0.0
        %437 = vmatpush1.msra.mxu0 0.0
        %438 = vmatprep.subr.mxu0 0.0
        %439 = vmatpush1.msra.mxu0 0.0
        %440 = vmatprep.subr.mxu0 0.0
        %441 = vmatpush1.msra.mxu0 0.0
        %442 = vmatprep.subr.mxu0 0.0
        %443 = vmatpush1.msra.mxu0 0.0
        %444 = vmatprep.subr.mxu0 0.0
        %445 = vmatpush1.msra.mxu0 0.0
        %446 = vmatprep.subr.mxu0 0.0
        %447 = vmatpush1.msra.mxu0 0.0
        %448 = vmatprep.subr.mxu0 0.0
        %449 = vmatpush1.msra.mxu0 0.0
        %450 = vmatprep.subr.mxu0 0.0
        %451 = vmatpush1.msra.mxu0 0.0
        %452 = vmatprep.subr.mxu0 0.0
        %453 = vmatpush1.msra.mxu0 0.0
        %454 = vmatprep.subr.mxu0 0.0
        %455 = vmatpush1.msra.mxu0 0.0
        %456 = vmatprep.subr.mxu0 0.0
        %457 = vmatpush1.msra.mxu0 0.0
        %458 = vmatprep.subr.mxu0 0.0
        %459 = vmatpush1.msra.mxu0 0.0
        %460 = vmatprep.subr.mxu0 0.0
        %461 = vmatpush1.msra.mxu0 0.0
        %462 = vmatprep.subr.mxu0 0.0
        %463 = vmatpush1.msra.mxu0 0.0
        %464 = vmatprep.subr.mxu0 0.0
        %465 = vmatpush1.msra.mxu0 0.0
        %466 = vmatprep.subr.mxu0 0.0
        %467 = vmatpush1.msra.mxu0 0.0
        %468 = vmatprep.subr.mxu0 0.0
        %469 = vmatpush1.msra.mxu0 0.0
        %470 = vmatprep.subr.mxu0 0.0
        %471 = vmatpush1.msra.mxu0 0.0
        %472 = vmatprep.subr.mxu0 0.0
        %473 = vmatpush1.msra.mxu0 0.0
        %474 = vmatprep.subr.mxu0 0.0
        %475 = vmatpush1.msra.mxu0 0.0
        %476 = vmatprep.subr.mxu0 0.0
        %477 = vmatpush1.msra.mxu0 0.0
        %478 = vmatprep.subr.mxu0 0.0
        %479 = vmatpush1.msra.mxu0 0.0
        %480 = vmatprep.subr.mxu0 0.0
        %481 = vmatpush1.msra.mxu0 0.0
        %482 = vmatprep.mubr.f32.mxu0 0.0
        %483 = vmatmul.mubr.f32.gmra.mrb[0].mxu0 %v403
        %v484 = vpop.f32.mrb[0].mxu0
        %v485 = vadd.f32 %v399, %v484
        %v486 = vpop.f32.mrb[0].mxu0
        %487 = vmatprep.mubr.f32.mxu0 0.0
        %488 = vmatmul.mubr.f32.gmra.mrb[0].mxu0 %v406
        %v489 = vpop.f32.mrb[0].mxu0
        %v490 = vadd.f32 %v399, %v489
        %v491 = vpop.f32.mrb[0].mxu0
        %492 = vmatprep.mubr.f32.mxu0 0.0
        %493 = vmatmul.mubr.f32.gmra.mrb[0].mxu0 %v409
        %v494 = vpop.f32.mrb[0].mxu0
        %v495 = vadd.f32 %v399, %v494
        %v496 = vpop.f32.mrb[0].mxu0
        %497 = vmatprep.mubr.f32.mxu0 0.0
        %498 = vmatmul.mubr.f32.gmra.mrb[0].mxu0 %v412
        %v499 = vpop.f32.mrb[0].mxu0
        %v500 = vadd.f32 %v399, %v499
        %v501 = vpop.f32.mrb[0].mxu0
        %502 = vdwg.mxu0
        %v503 = vld [vmem:[%s5] sm:$0x1]
        %v505 = vlaneseq
        %v506 = vshrl.u32 %v505, 7
        %v507 = vsub.s32 0, %v506
        %v508 = vrot.slane %v503, %v507
        %v510 = vmul.f32 %v485, %v508
        %v511 = vmul.f32 %v490, %v508
        %v512 = vmul.f32 %v495, %v508
        %v513 = vmul.f32 %v500, %v508
        %v514 = vld [vmem:[%s6] sm:$0x1]
        %v516 = vlaneseq
        %v517 = vshrl.u32 %v516, 7
        %v518 = vsub.s32 0, %v517
        %v519 = vrot.slane %v514, %v518
        %v521 = vadd.f32 %v510, %v519
        %v522 = vadd.f32 %v511, %v519
        %v523 = vadd.f32 %v512, %v519
        %v524 = vadd.f32 %v513, %v519
        %v525 = vmax.f32 %v521, 0.0
        %v526 = vmax.f32 %v522, 0.0
        %v527 = vmax.f32 %v523, 0.0
        %v528 = vmax.f32 %v524, 0.0
        %v529 = vld [vmem:[%s7] sm:$0x1]
        %v530 = vmin.f32 %v521, 0.0
        %v531 = vmin.f32 %v522, 0.0
        %v532 = vmin.f32 %v523, 0.0
        %v533 = vmin.f32 %v524, 0.0
        %v535 = vlaneseq
        %v536 = vshrl.u32 %v535, 7
        %v537 = vsub.s32 0, %v536
        %v538 = vrot.slane %v529, %v537
        %v540 = vmul.f32 %v538, %v530
        %v541 = vmul.f32 %v538, %v531
        %v542 = vmul.f32 %v538, %v532
        %v543 = vmul.f32 %v538, %v533
        %v544 = vadd.f32 %v525, %v540
        %v545 = vadd.f32 %v526, %v541
        %v546 = vadd.f32 %v527, %v542
        %v547 = vadd.f32 %v528, %v543
        %vm552 = vcmask 1040384
        %v553 = vrot.slane %v544, 7
        %v554 = vrot.slane %v545, 7
        %v555 = vsel %vm552, %v553, %v554
        %v556 = vrot.slane %v546, 7
        %v557 = vsel %vm552, %v554, %v556
        %v558 = vrot.slane %v547, 7
        %v559 = vsel %vm552, %v556, %v558
        %v565 = vsel %vm552, -inf, %v553
        %v566 = vsel %vm552, %v558, -inf
        %v569 = vrot.slane %v565, 1
        %v570 = vrot.slane %v555, 1
        %v571 = vsel %vm332, %v569, %v570
        %v572 = vrot.slane %v557, 1
        %v573 = vsel %vm332, %v570, %v572
        %v574 = vrot.slane %v559, 1
        %v575 = vsel %vm332, %v572, %v574
        %v576 = vrot.slane %v566, 1
        %v577 = vsel %vm332, %v574, %v576
        %v582 = vmax.f32 %v565, %v571
        %v583 = vmax.f32 %v555, %v573
        %v584 = vmax.f32 %v557, %v575
        %v585 = vmax.f32 %v559, %v577
        %v586 = vrot.slane %v565, 2
        %v587 = vrot.slane %v555, 2
        %v588 = vsel %vm364, %v586, %v587
        %v589 = vrot.slane %v557, 2
        %v590 = vsel %vm364, %v587, %v589
        %v591 = vrot.slane %v559, 2
        %v592 = vsel %vm364, %v589, %v591
        %v593 = vrot.slane %v566, 2
        %v594 = vsel %vm364, %v591, %v593
        %v599 = vmax.f32 %v582, %v588
        %v600 = vmax.f32 %v583, %v590
        %v601 = vmax.f32 %v584, %v592
        %v602 = vmax.f32 %v585, %v594
        %603 = vst [vmem:[%s298] sm:$0xff] %v599
        %604 = vst [vmem:[%s298 + $0x8] sm:$0xff] %v600
        %605 = vst [vmem:[%s298 + $0x10] sm:$0xff] %v601
        %606 = vst [vmem:[%s298 + $0x18] sm:$0xff] %v602
        %s607 = sand.u32 %s203, 1
        %s608 = scalar_lea.sflag [#allocation3], %s607
        %s609 = sand.u32 %s203, 1
        %s610 = smul.addr %s609, 32
        %s611 = scalar_lea.vmem [#allocation2], %s610
        // Predicated region
        $region53: #{tpu_custom_call.1} parent=51 // pred_check
          %p612 = pneg %p213
        $region54: #{tpu_custom_call.1} parent=51 // pred_check_branch
          %614 = sbr.rel (%p612) target = $region56
        $region55: #{tpu_custom_call.1} parent=51 // pred_region
          %s616 = ssub.s32 512, 512
          %617 = vsyncadd %s608, %s616
          %s618 = smul.addr %s22, 4
          %s619 = smul.addr %s618, 128
          %s620 = scalar_lea.hbm %s8, %s619
          %s621 = sshll.u32 %s611, 4
          %s622 = int_to_ptr.vmem [resolvable:$true] %s621
          %627 = dma.vmem_to_hbm [thread:$0]  %s622, 512, %s620, %s608, 128, 128, 8
        $region56: #{tpu_custom_call.1} parent=51 // pred_fallthru
          _
      $region52: #{tpu_custom_call.1} parent=5 // pred_fallthru
        _
      %p628 = scmp.le.s32.totalorder 2, %s17
      // Predicated region
      $region57: #{tpu_custom_call.1} parent=5 // pred_check
        %p629 = pneg %p628
      $region58: #{tpu_custom_call.1} parent=5 // pred_check_branch
        %631 = sbr.rel (%p629) target = $region60
      $region59: #{tpu_custom_call.1} parent=5 // pred_region
        %s632 = ssub.s32 %s17, 2
        // Predicated region
        $region61: #{tpu_custom_call.1} parent=59 // pred_check
          %p633 = pneg %p219
        $region62: #{tpu_custom_call.1} parent=59 // pred_check_branch
          %635 = sbr.rel (%p633) target = $region64
        $region63: #{tpu_custom_call.1} parent=59 // pred_region
          %s636 = sand.u32 %s204, 1
          %s637 = scalar_lea.sflag [#allocation3], %s636
          %s638 = sand.u32 %s204, 1
          %s639 = smul.addr %s638, 32
          %s640 = scalar_lea.vmem [#allocation2], %s639
          %641 = dma.done %s637, 512
        $region64: #{tpu_custom_call.1} parent=59 // pred_fallthru
          _
      $region60: #{tpu_custom_call.1} parent=5 // pred_fallthru
        _
    $region6: #{tpu_custom_call.1} parent=1 // loop_footer
      %s21 = sadd.s32 1, %s17
    $region7: #{tpu_custom_call.1} parent=1 // loop_footer_branch
      %16 = sbr.rel target = $region3
    $region8: #{tpu_custom_call.1} parent=1 // loop_exit
      _
    %642 = vsyncpa [#allocation3], 1
    %s643 = scalar_lea.sflag [#allocation3], 1
    %644 = vsyncpa %s643, 1

</llo_original>
